<compile_context>
chip_gen: v7x
topology: tpu7x:2x2x1
jax: 0.10.0
libtpu: 0.0.40
codegen_flags: <defaults>
</compile_context>

<pallas_src>
import functools

import jax
import jax.numpy as jnp
from jax import lax
from jax.experimental import pallas as pl
from jax.experimental.pallas import tpu as pltpu  # noqa: F401  (TPU backend assumed)

SELU_ALPHA = 1.6732632423543772
SELU_SCALE = 1.0507009873554805
LN_EPS = 1e-5


def _sfnn_kernel(x_ref, w_inp_ref, b_inp_ref, w1s_ref, b1s_ref, w2s_ref,
                 b2s_ref, g_ref, be_ref, w_out_ref, b_out_ref, o_ref,
                 *, batch, n_series, seq_len, norm_len, n_layers):
    xt = x_ref[...]                                             # (B*N, S)

    # need_norm: per-(batch, series) mean over the last norm_len time steps
    # (time is on lanes, so this is one small lane reduction).
    mean = jnp.mean(xt[:, seq_len - norm_len:], axis=-1, keepdims=True)  # (B*N, 1)
    h = xt - mean

    # inp_proj: Linear(seq_len, seq_len) on the time axis for all B*N rows.
    h = jnp.dot(h, w_inp_ref[...], preferred_element_type=jnp.float32)
    h = h + b_inp_ref[...]                                      # (B*N, S) + (1, S)

    inv_cnt = 1.0 / (n_series * seq_len)
    for i in range(n_layers):
        # layers1[i]: Linear over seq_len, ReLU, residual — one batched dot.
        t = jnp.dot(h, w1s_ref[i], preferred_element_type=jnp.float32)
        t = t + b1s_ref[i]                                      # (B*N, S) + (1, S)
        h = jnp.maximum(t, 0.0) + h

        # mixer + LayerNorm operate on per-batch (N, S) blocks; B is tiny so
        # this Python loop unrolls with sublane-aligned (N == 8) static slices.
        w2 = w2s_ref[i]                                         # (N, N)
        b2 = b2s_ref[i]                                         # (N, 1)
        g = g_ref[i]                                            # (N, S)
        be = be_ref[i]                                          # (N, S)
        parts = []
        for b in range(batch):
            hb = h[b * n_series:(b + 1) * n_series, :]          # (N, S)

            # layers2[i]: Linear over n_series => left-matmul in this layout.
            t2 = jnp.dot(w2, hb, preferred_element_type=jnp.float32) + b2
            selu = SELU_SCALE * jnp.where(
                t2 > 0, t2, SELU_ALPHA * (jnp.exp(t2) - 1.0))
            hb = selu + hb

            # LayerNorm([n_series, seq_len]) with fused single-pass stats
            # (var = E[h^2] - mu^2; fine at f32 with O(1) activations).
            mu = jnp.sum(hb, keepdims=True) * inv_cnt           # (1, 1)
            ms = jnp.sum(hb * hb, keepdims=True) * inv_cnt      # (1, 1)
            var = ms - mu * mu
            hb = (hb - mu) * lax.rsqrt(var + LN_EPS) * g + be
            parts.append(hb)
        h = jnp.concatenate(parts, axis=0)                      # (B*N, S)

    # out_proj: Linear(seq_len, pred_len); add the need_norm mean back; write
    # the whole result once as a single (B*N, P) slab.
    o = jnp.dot(h, w_out_ref[...], preferred_element_type=jnp.float32)
    o_ref[...] = o + b_out_ref[...] + mean                      # (B*N, P)


def sfnn_forward(x, params, *, seq_len, n_series, pred_len, n_layers, norm_len):
    B = x.shape[0]
    (w_inp, b_inp, w1s, b1s, w2s, b2s, gammas, betas, w_out, b_out) = params

    # Wrapper-side layout plumbing (tiny XLA transposes/reshapes):
    #  - activations (B, S, N) -> (B*N, S): batch folded into sublanes, time
    #    on lanes, so every Linear(seq_len, *) is a plain row-major matmul.
    #  - Linear(seq_len, *) weights pre-transposed to (in, out).
    x_t = jnp.swapaxes(x, 1, 2).reshape(B * n_series, seq_len)
    w_inp_t = w_inp.T                                   # (S, S)  (in, out)
    b_inp_r = b_inp.reshape(1, seq_len)                 # (1, S)
    w1s_t = jnp.swapaxes(w1s, 1, 2)                     # (L, S, S) (in, out)
    b1s_r = b1s.reshape(n_layers, 1, seq_len)           # (L, 1, S)
    b2s_c = b2s.reshape(n_layers, n_series, 1)          # (L, N, 1)
    w_out_t = w_out.T                                   # (S, P)  (in, out)
    b_out_r = b_out.reshape(1, pred_len)                # (1, P)

    kernel = functools.partial(
        _sfnn_kernel, batch=B, n_series=n_series, seq_len=seq_len,
        norm_len=norm_len, n_layers=n_layers)

    # Single invocation, no grid: all operands are tiny and live wholly in
    # VMEM (default whole-array BlockSpecs).
    # TODO(synk): for production shapes (large seq_len / n_layers) the stacked
    # (L, ...) weights should get a grid axis over layers instead of living in
    # VMEM all at once (matters most on v7x's 64 MiB VMEM).
    out_flat = pl.pallas_call(
        kernel,
        out_shape=jax.ShapeDtypeStruct((B * n_series, pred_len), jnp.float32),
    )(x_t, w_inp_t, b_inp_r, w1s_t, b1s_r, w2s, b2s_c, gammas, betas,
      w_out_t, b_out_r)

    # (B*N, P) -> (B, P, N), matching the PyTorch module output.
    return jnp.swapaxes(out_flat.reshape(B, n_series, pred_len), 1, 2)


def make_params(key, *, seq_len, n_series, pred_len, n_layers):
    """Parameters in the PyTorch nn.Linear convention (weight = (out, in))."""
    ks = jax.random.split(key, 10)
    scale = 0.2
    w_inp = scale * jax.random.normal(ks[0], (seq_len, seq_len), jnp.float32)
    b_inp = scale * jax.random.normal(ks[1], (seq_len,), jnp.float32)
    w1s = scale * jax.random.normal(ks[2], (n_layers, seq_len, seq_len), jnp.float32)
    b1s = scale * jax.random.normal(ks[3], (n_layers, seq_len), jnp.float32)
    w2s = scale * jax.random.normal(ks[4], (n_layers, n_series, n_series), jnp.float32)
    b2s = scale * jax.random.normal(ks[5], (n_layers, n_series), jnp.float32)
    gammas = 1.0 + 0.05 * jax.random.normal(
        ks[6], (n_layers, n_series, seq_len), jnp.float32)
    betas = 0.05 * jax.random.normal(
        ks[7], (n_layers, n_series, seq_len), jnp.float32)
    w_out = scale * jax.random.normal(ks[8], (pred_len, seq_len), jnp.float32)
    b_out = scale * jax.random.normal(ks[9], (pred_len,), jnp.float32)
    return (w_inp, b_inp, w1s, b1s, w2s, b2s, gammas, betas, w_out, b_out)


def reference_forward(x, params, *, norm_len, n_layers):
    """Pure-JAX port of the PyTorch forward (eval mode), for verification."""
    (w_inp, b_inp, w1s, b1s, w2s, b2s, gammas, betas, w_out, b_out) = params
    mean = jnp.mean(x[:, -norm_len:], axis=1, keepdims=True)        # (B,1,N)
    h = x - mean
    h = jnp.swapaxes(h, 1, -1)                                      # (B,N,S)
    h = h @ w_inp.T + b_inp
    for i in range(n_layers):
        h = jax.nn.relu(h @ w1s[i].T + b1s[i]) + h
        ht = jnp.swapaxes(h, 1, -1)                                 # (B,S,N)
        ht = jax.nn.selu(ht @ w2s[i].T + b2s[i]) + ht
        h = jnp.swapaxes(ht, 1, -1)
        mu = jnp.mean(h, axis=(1, 2), keepdims=True)
        var = jnp.mean((h - mu) ** 2, axis=(1, 2), keepdims=True)
        h = (h - mu) / jnp.sqrt(var + LN_EPS) * gammas[i] + betas[i]
    h = h @ w_out.T + b_out                                         # (B,N,P)
    h = jnp.swapaxes(h, 1, -1)                                      # (B,P,N)
    return h + mean


if __name__ == "__main__":
    # Config (mirrors the PyTorch `configs`):
    B, seq_len, n_series, pred_len = 2, 16, 8, 12
    n_layers, norm_len = 2, 4
    # need_norm=True, mixer=True, layernorm=True, dropout=0.0 (eval mode)

    key = jax.random.PRNGKey(0)
    kx, kp = jax.random.split(key)
    x = jax.random.normal(kx, (B, seq_len, n_series), jnp.float32)
    params = make_params(kp, seq_len=seq_len, n_series=n_series,
                         pred_len=pred_len, n_layers=n_layers)

    out = sfnn_forward(x, params, seq_len=seq_len, n_series=n_series,
                       pred_len=pred_len, n_layers=n_layers, norm_len=norm_len)
    out = jax.block_until_ready(out)

    ref = jax.block_until_ready(
        reference_forward(x, params, norm_len=norm_len, n_layers=n_layers))

    assert out.shape == (B, pred_len, n_series)
    max_err = float(jnp.max(jnp.abs(out - ref)))
    assert jnp.allclose(out, ref, atol=2e-3, rtol=2e-3), max_err
    print("KERNEL_OK")
</pallas_src>

<mosaic_0001>
module attributes {stable_mosaic.version = 11 : i64} {
  func.func @_sfnn_kernel(%arg0: memref<16x16xf32, #tpu.memory_space<vmem>>, %arg1: memref<16x16xf32, #tpu.memory_space<vmem>>, %arg2: memref<1x16xf32, #tpu.memory_space<vmem>>, %arg3: memref<2x16x16xf32, #tpu.memory_space<vmem>>, %arg4: memref<2x1x16xf32, #tpu.memory_space<vmem>>, %arg5: memref<2x8x8xf32, #tpu.memory_space<vmem>>, %arg6: memref<2x8x1xf32, #tpu.memory_space<vmem>>, %arg7: memref<2x8x16xf32, #tpu.memory_space<vmem>>, %arg8: memref<2x8x16xf32, #tpu.memory_space<vmem>>, %arg9: memref<16x12xf32, #tpu.memory_space<vmem>>, %arg10: memref<1x12xf32, #tpu.memory_space<vmem>>, %arg11: memref<16x12xf32, #tpu.memory_space<vmem>>) attributes {dimension_semantics = [], scalar_prefetch = 0 : i64, scratch_operands = 0 : i64, tpu.core_type = #tpu.core_type<tc>} {
    %c0 = arith.constant 0 : index
    %c0_0 = arith.constant 0 : index
    %0 = vector.load %arg0[%c0, %c0_0] : memref<16x16xf32, #tpu.memory_space<vmem>>, vector<16x16xf32>
    %1 = vector.extract_strided_slice %0 {offsets = [0, 12], sizes = [16, 4], strides = [1, 1]} : vector<16x16xf32> to vector<16x4xf32>
    %cst = arith.constant dense<0.000000e+00> : vector<16xf32>
    %2 = vector.multi_reduction <add>, %1, %cst [1] : vector<16x4xf32> to vector<16xf32>
    %3 = vector.shape_cast %2 : vector<16xf32> to vector<16x1xf32>
    %cst_1 = arith.constant 4.000000e+00 : f32
    %4 = vector.broadcast %cst_1 : f32 to vector<16x1xf32>
    %5 = arith.divf %3, %4 : vector<16x1xf32>
    %6 = vector.broadcast %5 : vector<16x1xf32> to vector<16x16xf32>
    %7 = arith.subf %0, %6 : vector<16x16xf32>
    %c0_2 = arith.constant 0 : index
    %c0_3 = arith.constant 0 : index
    %8 = vector.load %arg1[%c0_2, %c0_3] : memref<16x16xf32, #tpu.memory_space<vmem>>, vector<16x16xf32>
    %cst_4 = arith.constant dense<0.000000e+00> : vector<16x16xf32>
    %9 = tpu.matmul %7, %8, %cst_4 {dimension_numbers = #tpu.dot_dimension_numbers<[1], [0], [0], [1], [0, 0, 1, 1], [], []>} : vector<16x16xf32>, vector<16x16xf32>, vector<16x16xf32> -> vector<16x16xf32>
    %c0_5 = arith.constant 0 : index
    %c0_6 = arith.constant 0 : index
    %10 = vector.load %arg2[%c0_5, %c0_6] : memref<1x16xf32, #tpu.memory_space<vmem>>, vector<1x16xf32>
    %11 = vector.broadcast %10 : vector<1x16xf32> to vector<16x16xf32>
    %12 = arith.addf %9, %11 : vector<16x16xf32>
    %c0_7 = arith.constant 0 : index
    %c0_8 = arith.constant 0 : index
    %c0_9 = arith.constant 0 : index
    %13 = vector.load %arg3[%c0_7, %c0_8, %c0_9] : memref<2x16x16xf32, #tpu.memory_space<vmem>>, vector<1x16x16xf32>
    %14 = vector.shape_cast %13 : vector<1x16x16xf32> to vector<16x16xf32>
    %cst_10 = arith.constant dense<0.000000e+00> : vector<16x16xf32>
    %15 = tpu.matmul %12, %14, %cst_10 {dimension_numbers = #tpu.dot_dimension_numbers<[1], [0], [0], [1], [0, 0, 1, 1], [], []>} : vector<16x16xf32>, vector<16x16xf32>, vector<16x16xf32> -> vector<16x16xf32>
    %c0_11 = arith.constant 0 : index
    %c0_12 = arith.constant 0 : index
    %c0_13 = arith.constant 0 : index
    %16 = vector.load %arg4[%c0_11, %c0_12, %c0_13] : memref<2x1x16xf32, #tpu.memory_space<vmem>>, vector<1x1x16xf32>
    %17 = vector.shape_cast %16 : vector<1x1x16xf32> to vector<1x16xf32>
    %18 = vector.broadcast %17 : vector<1x16xf32> to vector<16x16xf32>
    %19 = arith.addf %15, %18 : vector<16x16xf32>
    %cst_14 = arith.constant 0.000000e+00 : f32
    %20 = vector.broadcast %cst_14 : f32 to vector<16x16xf32>
    %21 = arith.maximumf %19, %20 : vector<16x16xf32>
    %22 = arith.addf %21, %12 : vector<16x16xf32>
    %c0_15 = arith.constant 0 : index
    %c0_16 = arith.constant 0 : index
    %c0_17 = arith.constant 0 : index
    %23 = vector.load %arg5[%c0_15, %c0_16, %c0_17] : memref<2x8x8xf32, #tpu.memory_space<vmem>>, vector<1x8x8xf32>
    %24 = vector.shape_cast %23 : vector<1x8x8xf32> to vector<8x8xf32>
    %c0_18 = arith.constant 0 : index
    %c0_19 = arith.constant 0 : index
    %c0_20 = arith.constant 0 : index
    %25 = vector.load %arg6[%c0_18, %c0_19, %c0_20] : memref<2x8x1xf32, #tpu.memory_space<vmem>>, vector<1x8x1xf32>
    %26 = vector.shape_cast %25 : vector<1x8x1xf32> to vector<8x1xf32>
    %c0_21 = arith.constant 0 : index
    %c0_22 = arith.constant 0 : index
    %c0_23 = arith.constant 0 : index
    %27 = vector.load %arg7[%c0_21, %c0_22, %c0_23] : memref<2x8x16xf32, #tpu.memory_space<vmem>>, vector<1x8x16xf32>
    %28 = vector.shape_cast %27 : vector<1x8x16xf32> to vector<8x16xf32>
    %c0_24 = arith.constant 0 : index
    %c0_25 = arith.constant 0 : index
    %c0_26 = arith.constant 0 : index
    %29 = vector.load %arg8[%c0_24, %c0_25, %c0_26] : memref<2x8x16xf32, #tpu.memory_space<vmem>>, vector<1x8x16xf32>
    %30 = vector.shape_cast %29 : vector<1x8x16xf32> to vector<8x16xf32>
    %31 = vector.extract_strided_slice %22 {offsets = [0, 0], sizes = [8, 16], strides = [1, 1]} : vector<16x16xf32> to vector<8x16xf32>
    %cst_27 = arith.constant dense<0.000000e+00> : vector<8x16xf32>
    %32 = tpu.matmul %24, %31, %cst_27 {dimension_numbers = #tpu.dot_dimension_numbers<[1], [0], [0], [1], [0, 0, 1, 1], [], []>} : vector<8x8xf32>, vector<8x16xf32>, vector<8x16xf32> -> vector<8x16xf32>
    %33 = vector.broadcast %26 : vector<8x1xf32> to vector<8x16xf32>
    %34 = arith.addf %32, %33 : vector<8x16xf32>
    %cst_28 = arith.constant 0.000000e+00 : f32
    %35 = vector.broadcast %cst_28 : f32 to vector<8x16xf32>
    %36 = arith.cmpf ogt, %34, %35 : vector<8x16xf32>
    %37 = math.exp %34 : vector<8x16xf32>
    %cst_29 = arith.constant 1.000000e+00 : f32
    %38 = vector.broadcast %cst_29 : f32 to vector<8x16xf32>
    %39 = arith.subf %37, %38 : vector<8x16xf32>
    %cst_30 = arith.constant 1.67326319 : f32
    %40 = vector.broadcast %cst_30 : f32 to vector<8x16xf32>
    %41 = arith.mulf %40, %39 : vector<8x16xf32>
    %42 = arith.select %36, %34, %41 : vector<8x16xi1>, vector<8x16xf32>
    %cst_31 = arith.constant 1.05070102 : f32
    %43 = vector.broadcast %cst_31 : f32 to vector<8x16xf32>
    %44 = arith.mulf %43, %42 : vector<8x16xf32>
    %45 = arith.addf %44, %31 : vector<8x16xf32>
    %46 = vector.shape_cast %45 : vector<8x16xf32> to vector<1x8x16xf32>
    %cst_32 = arith.constant dense<0.000000e+00> : vector<1xf32>
    %47 = vector.multi_reduction <add>, %46, %cst_32 [1, 2] : vector<1x8x16xf32> to vector<1xf32>
    %48 = vector.shape_cast %47 : vector<1xf32> to vector<1x1x1xf32>
    %49 = vector.extract %48[0, 0, 0] : f32 from vector<1x1x1xf32>
    %50 = vector.broadcast %49 : f32 to vector<1x1xf32>
    %cst_33 = arith.constant 7.812500e-03 : f32
    %51 = vector.broadcast %cst_33 : f32 to vector<1x1xf32>
    %52 = arith.mulf %50, %51 : vector<1x1xf32>
    %53 = arith.mulf %45, %45 : vector<8x16xf32>
    %54 = vector.shape_cast %53 : vector<8x16xf32> to vector<1x8x16xf32>
    %cst_34 = arith.constant dense<0.000000e+00> : vector<1xf32>
    %55 = vector.multi_reduction <add>, %54, %cst_34 [1, 2] : vector<1x8x16xf32> to vector<1xf32>
    %56 = vector.shape_cast %55 : vector<1xf32> to vector<1x1x1xf32>
    %57 = vector.extract %56[0, 0, 0] : f32 from vector<1x1x1xf32>
    %58 = vector.broadcast %57 : f32 to vector<1x1xf32>
    %cst_35 = arith.constant 7.812500e-03 : f32
    %59 = vector.broadcast %cst_35 : f32 to vector<1x1xf32>
    %60 = arith.mulf %58, %59 : vector<1x1xf32>
    %61 = arith.mulf %52, %52 : vector<1x1xf32>
    %62 = arith.subf %60, %61 : vector<1x1xf32>
    %63 = vector.broadcast %52 : vector<1x1xf32> to vector<8x16xf32>
    %64 = arith.subf %45, %63 : vector<8x16xf32>
    %cst_36 = arith.constant 9.99999974E-6 : f32
    %65 = vector.broadcast %cst_36 : f32 to vector<1x1xf32>
    %66 = arith.addf %62, %65 : vector<1x1xf32>
    %67 = math.rsqrt %66 : vector<1x1xf32>
    %68 = vector.broadcast %67 : vector<1x1xf32> to vector<8x16xf32>
    %69 = arith.mulf %64, %68 : vector<8x16xf32>
    %70 = arith.mulf %69, %28 : vector<8x16xf32>
    %71 = arith.addf %70, %30 : vector<8x16xf32>
    %72 = vector.extract_strided_slice %22 {offsets = [8, 0], sizes = [8, 16], strides = [1, 1]} : vector<16x16xf32> to vector<8x16xf32>
    %cst_37 = arith.constant dense<0.000000e+00> : vector<8x16xf32>
    %73 = tpu.matmul %24, %72, %cst_37 {dimension_numbers = #tpu.dot_dimension_numbers<[1], [0], [0], [1], [0, 0, 1, 1], [], []>} : vector<8x8xf32>, vector<8x16xf32>, vector<8x16xf32> -> vector<8x16xf32>
    %74 = vector.broadcast %26 : vector<8x1xf32> to vector<8x16xf32>
    %75 = arith.addf %73, %74 : vector<8x16xf32>
    %cst_38 = arith.constant 0.000000e+00 : f32
    %76 = vector.broadcast %cst_38 : f32 to vector<8x16xf32>
    %77 = arith.cmpf ogt, %75, %76 : vector<8x16xf32>
    %78 = math.exp %75 : vector<8x16xf32>
    %cst_39 = arith.constant 1.000000e+00 : f32
    %79 = vector.broadcast %cst_39 : f32 to vector<8x16xf32>
    %80 = arith.subf %78, %79 : vector<8x16xf32>
    %cst_40 = arith.constant 1.67326319 : f32
    %81 = vector.broadcast %cst_40 : f32 to vector<8x16xf32>
    %82 = arith.mulf %81, %80 : vector<8x16xf32>
    %83 = arith.select %77, %75, %82 : vector<8x16xi1>, vector<8x16xf32>
    %cst_41 = arith.constant 1.05070102 : f32
    %84 = vector.broadcast %cst_41 : f32 to vector<8x16xf32>
    %85 = arith.mulf %84, %83 : vector<8x16xf32>
    %86 = arith.addf %85, %72 : vector<8x16xf32>
    %87 = vector.shape_cast %86 : vector<8x16xf32> to vector<1x8x16xf32>
    %cst_42 = arith.constant dense<0.000000e+00> : vector<1xf32>
    %88 = vector.multi_reduction <add>, %87, %cst_42 [1, 2] : vector<1x8x16xf32> to vector<1xf32>
    %89 = vector.shape_cast %88 : vector<1xf32> to vector<1x1x1xf32>
    %90 = vector.extract %89[0, 0, 0] : f32 from vector<1x1x1xf32>
    %91 = vector.broadcast %90 : f32 to vector<1x1xf32>
    %cst_43 = arith.constant 7.812500e-03 : f32
    %92 = vector.broadcast %cst_43 : f32 to vector<1x1xf32>
    %93 = arith.mulf %91, %92 : vector<1x1xf32>
    %94 = arith.mulf %86, %86 : vector<8x16xf32>
    %95 = vector.shape_cast %94 : vector<8x16xf32> to vector<1x8x16xf32>
    %cst_44 = arith.constant dense<0.000000e+00> : vector<1xf32>
    %96 = vector.multi_reduction <add>, %95, %cst_44 [1, 2] : vector<1x8x16xf32> to vector<1xf32>
    %97 = vector.shape_cast %96 : vector<1xf32> to vector<1x1x1xf32>
    %98 = vector.extract %97[0, 0, 0] : f32 from vector<1x1x1xf32>
    %99 = vector.broadcast %98 : f32 to vector<1x1xf32>
    %cst_45 = arith.constant 7.812500e-03 : f32
    %100 = vector.broadcast %cst_45 : f32 to vector<1x1xf32>
    %101 = arith.mulf %99, %100 : vector<1x1xf32>
    %102 = arith.mulf %93, %93 : vector<1x1xf32>
    %103 = arith.subf %101, %102 : vector<1x1xf32>
    %104 = vector.broadcast %93 : vector<1x1xf32> to vector<8x16xf32>
    %105 = arith.subf %86, %104 : vector<8x16xf32>
    %cst_46 = arith.constant 9.99999974E-6 : f32
    %106 = vector.broadcast %cst_46 : f32 to vector<1x1xf32>
    %107 = arith.addf %103, %106 : vector<1x1xf32>
    %108 = math.rsqrt %107 : vector<1x1xf32>
    %109 = vector.broadcast %108 : vector<1x1xf32> to vector<8x16xf32>
    %110 = arith.mulf %105, %109 : vector<8x16xf32>
    %111 = arith.mulf %110, %28 : vector<8x16xf32>
    %112 = arith.addf %111, %30 : vector<8x16xf32>
    %113 = tpu.concatenate %71, %112 in 0 : vector<8x16xf32>, vector<8x16xf32> -> vector<16x16xf32>
    %c1 = arith.constant 1 : index
    %c0_47 = arith.constant 0 : index
    %c0_48 = arith.constant 0 : index
    %114 = vector.load %arg3[%c1, %c0_47, %c0_48] : memref<2x16x16xf32, #tpu.memory_space<vmem>>, vector<1x16x16xf32>
    %115 = vector.shape_cast %114 : vector<1x16x16xf32> to vector<16x16xf32>
    %cst_49 = arith.constant dense<0.000000e+00> : vector<16x16xf32>
    %116 = tpu.matmul %113, %115, %cst_49 {dimension_numbers = #tpu.dot_dimension_numbers<[1], [0], [0], [1], [0, 0, 1, 1], [], []>} : vector<16x16xf32>, vector<16x16xf32>, vector<16x16xf32> -> vector<16x16xf32>
    %c1_50 = arith.constant 1 : index
    %c0_51 = arith.constant 0 : index
    %c0_52 = arith.constant 0 : index
    %117 = vector.load %arg4[%c1_50, %c0_51, %c0_52] : memref<2x1x16xf32, #tpu.memory_space<vmem>>, vector<1x1x16xf32>
    %118 = vector.shape_cast %117 : vector<1x1x16xf32> to vector<1x16xf32>
    %119 = vector.broadcast %118 : vector<1x16xf32> to vector<16x16xf32>
    %120 = arith.addf %116, %119 : vector<16x16xf32>
    %cst_53 = arith.constant 0.000000e+00 : f32
    %121 = vector.broadcast %cst_53 : f32 to vector<16x16xf32>
    %122 = arith.maximumf %120, %121 : vector<16x16xf32>
    %123 = arith.addf %122, %113 : vector<16x16xf32>
    %c1_54 = arith.constant 1 : index
    %c0_55 = arith.constant 0 : index
    %c0_56 = arith.constant 0 : index
    %124 = vector.load %arg5[%c1_54, %c0_55, %c0_56] : memref<2x8x8xf32, #tpu.memory_space<vmem>>, vector<1x8x8xf32>
    %125 = vector.shape_cast %124 : vector<1x8x8xf32> to vector<8x8xf32>
    %c1_57 = arith.constant 1 : index
    %c0_58 = arith.constant 0 : index
    %c0_59 = arith.constant 0 : index
    %126 = vector.load %arg6[%c1_57, %c0_58, %c0_59] : memref<2x8x1xf32, #tpu.memory_space<vmem>>, vector<1x8x1xf32>
    %127 = vector.shape_cast %126 : vector<1x8x1xf32> to vector<8x1xf32>
    %c1_60 = arith.constant 1 : index
    %c0_61 = arith.constant 0 : index
    %c0_62 = arith.constant 0 : index
    %128 = vector.load %arg7[%c1_60, %c0_61, %c0_62] : memref<2x8x16xf32, #tpu.memory_space<vmem>>, vector<1x8x16xf32>
    %129 = vector.shape_cast %128 : vector<1x8x16xf32> to vector<8x16xf32>
    %c1_63 = arith.constant 1 : index
    %c0_64 = arith.constant 0 : index
    %c0_65 = arith.constant 0 : index
    %130 = vector.load %arg8[%c1_63, %c0_64, %c0_65] : memref<2x8x16xf32, #tpu.memory_space<vmem>>, vector<1x8x16xf32>
    %131 = vector.shape_cast %130 : vector<1x8x16xf32> to vector<8x16xf32>
    %132 = vector.extract_strided_slice %123 {offsets = [0, 0], sizes = [8, 16], strides = [1, 1]} : vector<16x16xf32> to vector<8x16xf32>
    %cst_66 = arith.constant dense<0.000000e+00> : vector<8x16xf32>
    %133 = tpu.matmul %125, %132, %cst_66 {dimension_numbers = #tpu.dot_dimension_numbers<[1], [0], [0], [1], [0, 0, 1, 1], [], []>} : vector<8x8xf32>, vector<8x16xf32>, vector<8x16xf32> -> vector<8x16xf32>
    %134 = vector.broadcast %127 : vector<8x1xf32> to vector<8x16xf32>
    %135 = arith.addf %133, %134 : vector<8x16xf32>
    %cst_67 = arith.constant 0.000000e+00 : f32
    %136 = vector.broadcast %cst_67 : f32 to vector<8x16xf32>
    %137 = arith.cmpf ogt, %135, %136 : vector<8x16xf32>
    %138 = math.exp %135 : vector<8x16xf32>
    %cst_68 = arith.constant 1.000000e+00 : f32
    %139 = vector.broadcast %cst_68 : f32 to vector<8x16xf32>
    %140 = arith.subf %138, %139 : vector<8x16xf32>
    %cst_69 = arith.constant 1.67326319 : f32
    %141 = vector.broadcast %cst_69 : f32 to vector<8x16xf32>
    %142 = arith.mulf %141, %140 : vector<8x16xf32>
    %143 = arith.select %137, %135, %142 : vector<8x16xi1>, vector<8x16xf32>
    %cst_70 = arith.constant 1.05070102 : f32
    %144 = vector.broadcast %cst_70 : f32 to vector<8x16xf32>
    %145 = arith.mulf %144, %143 : vector<8x16xf32>
    %146 = arith.addf %145, %132 : vector<8x16xf32>
    %147 = vector.shape_cast %146 : vector<8x16xf32> to vector<1x8x16xf32>
    %cst_71 = arith.constant dense<0.000000e+00> : vector<1xf32>
    %148 = vector.multi_reduction <add>, %147, %cst_71 [1, 2] : vector<1x8x16xf32> to vector<1xf32>
    %149 = vector.shape_cast %148 : vector<1xf32> to vector<1x1x1xf32>
    %150 = vector.extract %149[0, 0, 0] : f32 from vector<1x1x1xf32>
    %151 = vector.broadcast %150 : f32 to vector<1x1xf32>
    %cst_72 = arith.constant 7.812500e-03 : f32
    %152 = vector.broadcast %cst_72 : f32 to vector<1x1xf32>
    %153 = arith.mulf %151, %152 : vector<1x1xf32>
    %154 = arith.mulf %146, %146 : vector<8x16xf32>
    %155 = vector.shape_cast %154 : vector<8x16xf32> to vector<1x8x16xf32>
    %cst_73 = arith.constant dense<0.000000e+00> : vector<1xf32>
    %156 = vector.multi_reduction <add>, %155, %cst_73 [1, 2] : vector<1x8x16xf32> to vector<1xf32>
    %157 = vector.shape_cast %156 : vector<1xf32> to vector<1x1x1xf32>
    %158 = vector.extract %157[0, 0, 0] : f32 from vector<1x1x1xf32>
    %159 = vector.broadcast %158 : f32 to vector<1x1xf32>
    %cst_74 = arith.constant 7.812500e-03 : f32
    %160 = vector.broadcast %cst_74 : f32 to vector<1x1xf32>
    %161 = arith.mulf %159, %160 : vector<1x1xf32>
    %162 = arith.mulf %153, %153 : vector<1x1xf32>
    %163 = arith.subf %161, %162 : vector<1x1xf32>
    %164 = vector.broadcast %153 : vector<1x1xf32> to vector<8x16xf32>
    %165 = arith.subf %146, %164 : vector<8x16xf32>
    %cst_75 = arith.constant 9.99999974E-6 : f32
    %166 = vector.broadcast %cst_75 : f32 to vector<1x1xf32>
    %167 = arith.addf %163, %166 : vector<1x1xf32>
    %168 = math.rsqrt %167 : vector<1x1xf32>
    %169 = vector.broadcast %168 : vector<1x1xf32> to vector<8x16xf32>
    %170 = arith.mulf %165, %169 : vector<8x16xf32>
    %171 = arith.mulf %170, %129 : vector<8x16xf32>
    %172 = arith.addf %171, %131 : vector<8x16xf32>
    %173 = vector.extract_strided_slice %123 {offsets = [8, 0], sizes = [8, 16], strides = [1, 1]} : vector<16x16xf32> to vector<8x16xf32>
    %cst_76 = arith.constant dense<0.000000e+00> : vector<8x16xf32>
    %174 = tpu.matmul %125, %173, %cst_76 {dimension_numbers = #tpu.dot_dimension_numbers<[1], [0], [0], [1], [0, 0, 1, 1], [], []>} : vector<8x8xf32>, vector<8x16xf32>, vector<8x16xf32> -> vector<8x16xf32>
    %175 = vector.broadcast %127 : vector<8x1xf32> to vector<8x16xf32>
    %176 = arith.addf %174, %175 : vector<8x16xf32>
    %cst_77 = arith.constant 0.000000e+00 : f32
    %177 = vector.broadcast %cst_77 : f32 to vector<8x16xf32>
    %178 = arith.cmpf ogt, %176, %177 : vector<8x16xf32>
    %179 = math.exp %176 : vector<8x16xf32>
    %cst_78 = arith.constant 1.000000e+00 : f32
    %180 = vector.broadcast %cst_78 : f32 to vector<8x16xf32>
    %181 = arith.subf %179, %180 : vector<8x16xf32>
    %cst_79 = arith.constant 1.67326319 : f32
    %182 = vector.broadcast %cst_79 : f32 to vector<8x16xf32>
    %183 = arith.mulf %182, %181 : vector<8x16xf32>
    %184 = arith.select %178, %176, %183 : vector<8x16xi1>, vector<8x16xf32>
    %cst_80 = arith.constant 1.05070102 : f32
    %185 = vector.broadcast %cst_80 : f32 to vector<8x16xf32>
    %186 = arith.mulf %185, %184 : vector<8x16xf32>
    %187 = arith.addf %186, %173 : vector<8x16xf32>
    %188 = vector.shape_cast %187 : vector<8x16xf32> to vector<1x8x16xf32>
    %cst_81 = arith.constant dense<0.000000e+00> : vector<1xf32>
    %189 = vector.multi_reduction <add>, %188, %cst_81 [1, 2] : vector<1x8x16xf32> to vector<1xf32>
    %190 = vector.shape_cast %189 : vector<1xf32> to vector<1x1x1xf32>
    %191 = vector.extract %190[0, 0, 0] : f32 from vector<1x1x1xf32>
    %192 = vector.broadcast %191 : f32 to vector<1x1xf32>
    %cst_82 = arith.constant 7.812500e-03 : f32
    %193 = vector.broadcast %cst_82 : f32 to vector<1x1xf32>
    %194 = arith.mulf %192, %193 : vector<1x1xf32>
    %195 = arith.mulf %187, %187 : vector<8x16xf32>
    %196 = vector.shape_cast %195 : vector<8x16xf32> to vector<1x8x16xf32>
    %cst_83 = arith.constant dense<0.000000e+00> : vector<1xf32>
    %197 = vector.multi_reduction <add>, %196, %cst_83 [1, 2] : vector<1x8x16xf32> to vector<1xf32>
    %198 = vector.shape_cast %197 : vector<1xf32> to vector<1x1x1xf32>
    %199 = vector.extract %198[0, 0, 0] : f32 from vector<1x1x1xf32>
    %200 = vector.broadcast %199 : f32 to vector<1x1xf32>
    %cst_84 = arith.constant 7.812500e-03 : f32
    %201 = vector.broadcast %cst_84 : f32 to vector<1x1xf32>
    %202 = arith.mulf %200, %201 : vector<1x1xf32>
    %203 = arith.mulf %194, %194 : vector<1x1xf32>
    %204 = arith.subf %202, %203 : vector<1x1xf32>
    %205 = vector.broadcast %194 : vector<1x1xf32> to vector<8x16xf32>
    %206 = arith.subf %187, %205 : vector<8x16xf32>
    %cst_85 = arith.constant 9.99999974E-6 : f32
    %207 = vector.broadcast %cst_85 : f32 to vector<1x1xf32>
    %208 = arith.addf %204, %207 : vector<1x1xf32>
    %209 = math.rsqrt %208 : vector<1x1xf32>
    %210 = vector.broadcast %209 : vector<1x1xf32> to vector<8x16xf32>
    %211 = arith.mulf %206, %210 : vector<8x16xf32>
    %212 = arith.mulf %211, %129 : vector<8x16xf32>
    %213 = arith.addf %212, %131 : vector<8x16xf32>
    %214 = tpu.concatenate %172, %213 in 0 : vector<8x16xf32>, vector<8x16xf32> -> vector<16x16xf32>
    %c0_86 = arith.constant 0 : index
    %c0_87 = arith.constant 0 : index
    %215 = vector.load %arg9[%c0_86, %c0_87] : memref<16x12xf32, #tpu.memory_space<vmem>>, vector<16x12xf32>
    %cst_88 = arith.constant dense<0.000000e+00> : vector<16x12xf32>
    %216 = tpu.matmul %214, %215, %cst_88 {dimension_numbers = #tpu.dot_dimension_numbers<[1], [0], [0], [1], [0, 0, 1, 1], [], []>} : vector<16x16xf32>, vector<16x12xf32>, vector<16x12xf32> -> vector<16x12xf32>
    %c0_89 = arith.constant 0 : index
    %c0_90 = arith.constant 0 : index
    %217 = vector.load %arg10[%c0_89, %c0_90] : memref<1x12xf32, #tpu.memory_space<vmem>>, vector<1x12xf32>
    %218 = vector.broadcast %217 : vector<1x12xf32> to vector<16x12xf32>
    %219 = arith.addf %216, %218 : vector<16x12xf32>
    %220 = vector.broadcast %5 : vector<16x1xf32> to vector<16x12xf32>
    %221 = arith.addf %219, %220 : vector<16x12xf32>
    %c0_91 = arith.constant 0 : index
    %c0_92 = arith.constant 0 : index
    %222 = vector.load %arg11[%c0_91, %c0_92] : memref<16x12xf32, #tpu.memory_space<vmem>>, vector<16x12xf32>
    tpu.vector_store %arg11[%c0_91, %c0_92], %221 {strides = array<i32>} : memref<16x12xf32, #tpu.memory_space<vmem>>, vector<16x12xf32>,
    return
  }
}

</mosaic_0001>

<llo_original>
// kernel: tpu_custom_call.1
$region0: #{tpu_custom_call.1}
  #allocation0 [shape = 'u32[]', space=smem, size = 0x4, offset = 0x4, fixed_abs, tag = 'smem constant byte address 0x4 - core index']
  #allocation1 [shape = 'u32[144,128]{1,0:T(1,128)}', space=vmem, size = 0x12000, scoped, tag = 'internal scratch']
  %s0 = inlined_call_operand.vmem [shape: f32[16,16], index: 0, kind: input, shape index: {}]
  %s1 = inlined_call_operand.hbm [shape: f32[16,16], index: 1, kind: input, shape index: {}]
  %s2 = inlined_call_operand.hbm [shape: f32[1,16], index: 2, kind: input, shape index: {}]
  %s3 = inlined_call_operand.hbm [shape: f32[2,16,16], index: 3, kind: input, shape index: {}]
  %s4 = inlined_call_operand.hbm [shape: f32[2,1,16], index: 4, kind: input, shape index: {}]
  %s5 = inlined_call_operand.vmem [shape: f32[2,8,8], index: 5, kind: input, shape index: {}]
  %s6 = inlined_call_operand.vmem [shape: f32[2,8,1], index: 6, kind: input, shape index: {}]
  %s7 = inlined_call_operand.hbm [shape: f32[2,8,16], index: 7, kind: input, shape index: {}]
  %s8 = inlined_call_operand.vmem [shape: f32[2,8,16], index: 8, kind: input, shape index: {}]
  %s9 = inlined_call_operand.hbm [shape: f32[16,12], index: 9, kind: input, shape index: {}]
  %s10 = inlined_call_operand.vmem [shape: f32[1,12], index: 10, kind: input, shape index: {}]
  %s11 = inlined_call_operand.hbm [shape: f32[16,12], index: 11, kind: output, shape index: {}]
  %s12 = sld [smem:[#allocation0]]
  $region78: #{tpu_custom_call.1} parent=0
    _
  %s14 = ssub.s32 1, %s12
  %s15 = scalar_select 0, %s14, %s12
  $region1: #{tpu_custom_call.1} parent=0
    #allocation2 [shape = 'u8[8192]{0}', space=vmem, size = 0x2000, scoped, tag = 'input window, operand 1, single buffered']
    #allocation3 [shape = 's32[1]{0}', space=sflag, size = 0x4, scoped, tag = 'scoped memory for tpu_custom_call.1']
    #allocation4 [shape = 's32[1]{0}', space=sflag, size = 0x4, scoped, tag = 'scoped memory for tpu_custom_call.1']
    #allocation5 [shape = 'u8[512]{0}', space=vmem, size = 0x400, scoped, tag = 'input window, operand 2, single buffered']
    #allocation6 [shape = 's32[1]{0}', space=sflag, size = 0x4, scoped, tag = 'scoped memory for tpu_custom_call.1']
    #allocation7 [shape = 'u8[16384]{0}', space=vmem, size = 0x4000, scoped, tag = 'input window, operand 3, single buffered']
    #allocation8 [shape = 'u8[1024]{0}', space=vmem, size = 0x400, scoped, tag = 'input window, operand 4, single buffered']
    #allocation9 [shape = 's32[1]{0}', space=sflag, size = 0x4, scoped, tag = 'scoped memory for tpu_custom_call.1']
    #allocation10 [shape = 'u8[8192]{0}', space=vmem, size = 0x2000, scoped, tag = 'input window, operand 7, single buffered']
    #allocation11 [shape = 'u8[8192]{0}', space=vmem, size = 0x2000, scoped, tag = 'input window, operand 9, single buffered']
    #allocation12 [shape = 's32[1]{0}', space=sflag, size = 0x4, scoped, tag = 'scoped memory for tpu_custom_call.1']
    #allocation13 [shape = 'u8[8192]{0}', space=vmem, size = 0x2000, scoped, tag = 'output window, operand 0, single buffered']
    %16 = vsyncpa [#allocation3], 0
    %17 = vsyncpa [#allocation6], 0
    %18 = vsyncpa [#allocation9], 0
    %19 = vsyncpa [#allocation12], 0
    %20 = vsyncpa [#allocation4], 0
    // Predicated region
    $region2: #{tpu_custom_call.1} parent=1 // pred_check
      _
    $region3: #{tpu_custom_call.1} parent=1 // pred_check_branch
      %22 = sbr.rel (0) target = $region5
    $region4: #{tpu_custom_call.1} parent=1 // pred_region
      _
    $region5: #{tpu_custom_call.1} parent=1 // pred_fallthru
      _
    // Predicated region
    $region6: #{tpu_custom_call.1} parent=1 // pred_check
      _
    $region7: #{tpu_custom_call.1} parent=1 // pred_check_branch
      %24 = sbr.rel (0) target = $region9
    $region8: #{tpu_custom_call.1} parent=1 // pred_region
      %s26 = ssub.s32 256, 256
      %27 = vsyncadd [#allocation3], %s26
      %s28 = sshll.u32 [#allocation2], 4
      %s29 = int_to_ptr.vmem [resolvable:$true] %s28
      %34 = dma.hbm_to_vmem [thread:$0]  %s1, 256, %s29, [#allocation3], 128, 128, 8
    $region9: #{tpu_custom_call.1} parent=1 // pred_fallthru
      _
    // Predicated region
    $region10: #{tpu_custom_call.1} parent=1 // pred_check
      _
    $region11: #{tpu_custom_call.1} parent=1 // pred_check_branch
      %36 = sbr.rel (0) target = $region13
    $region12: #{tpu_custom_call.1} parent=1 // pred_region
      %s38 = ssub.s32 16, 16
      %39 = vsyncadd [#allocation6], %s38
      %s41 = sshll.u32 [#allocation5], 4
      %s42 = int_to_ptr.vmem [resolvable:$true] %s41
      %44 = dma.hbm_to_vmem [thread:$0]  %s2, 16, %s42, [#allocation6]
    $region13: #{tpu_custom_call.1} parent=1 // pred_fallthru
      _
    // Predicated region
    $region14: #{tpu_custom_call.1} parent=1 // pred_check
      _
    $region15: #{tpu_custom_call.1} parent=1 // pred_check_branch
      %46 = sbr.rel (0) target = $region17
    $region16: #{tpu_custom_call.1} parent=1 // pred_region
      %s48 = ssub.s32 512, 512
      %49 = vsyncadd [#allocation6], %s48
      %s50 = sshll.u32 [#allocation7], 4
      %s51 = int_to_ptr.vmem [resolvable:$true] %s50
      %56 = dma.hbm_to_vmem [thread:$0]  %s3, 512, %s51, [#allocation6], 128, 128, 8
    $region17: #{tpu_custom_call.1} parent=1 // pred_fallthru
      _
    // Predicated region
    $region18: #{tpu_custom_call.1} parent=1 // pred_check
      _
    $region19: #{tpu_custom_call.1} parent=1 // pred_check_branch
      %58 = sbr.rel (0) target = $region21
    $region20: #{tpu_custom_call.1} parent=1 // pred_region
      %s60 = ssub.s32 32, 32
      %61 = vsyncadd [#allocation9], %s60
      %s62 = sshll.u32 [#allocation8], 4
      %s63 = int_to_ptr.vmem [resolvable:$true] %s62
      %68 = dma.hbm_to_vmem [thread:$0]  %s4, 32, %s63, [#allocation9], 16, 16, 1
    $region21: #{tpu_custom_call.1} parent=1 // pred_fallthru
      _
    // Predicated region
    $region22: #{tpu_custom_call.1} parent=1 // pred_check
      _
    $region23: #{tpu_custom_call.1} parent=1 // pred_check_branch
      %70 = sbr.rel (0) target = $region25
    $region24: #{tpu_custom_call.1} parent=1 // pred_region
      _
    $region25: #{tpu_custom_call.1} parent=1 // pred_fallthru
      _
    // Predicated region
    $region26: #{tpu_custom_call.1} parent=1 // pred_check
      _
    $region27: #{tpu_custom_call.1} parent=1 // pred_check_branch
      %72 = sbr.rel (0) target = $region29
    $region28: #{tpu_custom_call.1} parent=1 // pred_region
      _
    $region29: #{tpu_custom_call.1} parent=1 // pred_fallthru
      _
    // Predicated region
    $region30: #{tpu_custom_call.1} parent=1 // pred_check
      _
    $region31: #{tpu_custom_call.1} parent=1 // pred_check_branch
      %74 = sbr.rel (0) target = $region33
    $region32: #{tpu_custom_call.1} parent=1 // pred_region
      %s76 = ssub.s32 256, 256
      %77 = vsyncadd [#allocation9], %s76
      %s78 = sshll.u32 [#allocation10], 4
      %s79 = int_to_ptr.vmem [resolvable:$true] %s78
      %84 = dma.hbm_to_vmem [thread:$0]  %s7, 256, %s79, [#allocation9], 128, 128, 8
    $region33: #{tpu_custom_call.1} parent=1 // pred_fallthru
      _
    // Predicated region
    $region34: #{tpu_custom_call.1} parent=1 // pred_check
      _
    $region35: #{tpu_custom_call.1} parent=1 // pred_check_branch
      %86 = sbr.rel (0) target = $region37
    $region36: #{tpu_custom_call.1} parent=1 // pred_region
      _
    $region37: #{tpu_custom_call.1} parent=1 // pred_fallthru
      _
    // Predicated region
    $region38: #{tpu_custom_call.1} parent=1 // pred_check
      _
    $region39: #{tpu_custom_call.1} parent=1 // pred_check_branch
      %88 = sbr.rel (0) target = $region41
    $region40: #{tpu_custom_call.1} parent=1 // pred_region
      %s90 = ssub.s32 256, 256
      %91 = vsyncadd [#allocation12], %s90
      %s92 = sshll.u32 [#allocation11], 4
      %s93 = int_to_ptr.vmem [resolvable:$true] %s92
      %98 = dma.hbm_to_vmem [thread:$0]  %s9, 256, %s93, [#allocation12], 128, 128, 8
    $region41: #{tpu_custom_call.1} parent=1 // pred_fallthru
      _
    // Predicated region
    $region42: #{tpu_custom_call.1} parent=1 // pred_check
      _
    $region43: #{tpu_custom_call.1} parent=1 // pred_check_branch
      %100 = sbr.rel (0) target = $region45
    $region44: #{tpu_custom_call.1} parent=1 // pred_region
      _
    $region45: #{tpu_custom_call.1} parent=1 // pred_fallthru
      _
    // Predicated region
    $region46: #{tpu_custom_call.1} parent=1 // pred_check
      _
    $region47: #{tpu_custom_call.1} parent=1 // pred_check_branch
      %102 = sbr.rel (0) target = $region49
    $region48: #{tpu_custom_call.1} parent=1 // pred_region
      %103 = dma.done [#allocation3], 256
    $region49: #{tpu_custom_call.1} parent=1 // pred_fallthru
      _
    // Predicated region
    $region50: #{tpu_custom_call.1} parent=1 // pred_check
      _
    $region51: #{tpu_custom_call.1} parent=1 // pred_check_branch
      %105 = sbr.rel (0) target = $region53
    $region52: #{tpu_custom_call.1} parent=1 // pred_region
      %106 = dma.done [#allocation6], 16
    $region53: #{tpu_custom_call.1} parent=1 // pred_fallthru
      _
    // Predicated region
    $region54: #{tpu_custom_call.1} parent=1 // pred_check
      _
    $region55: #{tpu_custom_call.1} parent=1 // pred_check_branch
      %108 = sbr.rel (0) target = $region57
    $region56: #{tpu_custom_call.1} parent=1 // pred_region
      %109 = dma.done [#allocation6], 512
    $region57: #{tpu_custom_call.1} parent=1 // pred_fallthru
      _
    // Predicated region
    $region58: #{tpu_custom_call.1} parent=1 // pred_check
      _
    $region59: #{tpu_custom_call.1} parent=1 // pred_check_branch
      %111 = sbr.rel (0) target = $region61
    $region60: #{tpu_custom_call.1} parent=1 // pred_region
      %112 = dma.done [#allocation9], 32
    $region61: #{tpu_custom_call.1} parent=1 // pred_fallthru
      _
    // Predicated region
    $region62: #{tpu_custom_call.1} parent=1 // pred_check
      _
    $region63: #{tpu_custom_call.1} parent=1 // pred_check_branch
      %114 = sbr.rel (0) target = $region65
    $region64: #{tpu_custom_call.1} parent=1 // pred_region
      %115 = dma.done [#allocation9], 256
    $region65: #{tpu_custom_call.1} parent=1 // pred_fallthru
      _
    // Predicated region
    $region66: #{tpu_custom_call.1} parent=1 // pred_check
      _
    $region67: #{tpu_custom_call.1} parent=1 // pred_check_branch
      %117 = sbr.rel (0) target = $region69
    $region68: #{tpu_custom_call.1} parent=1 // pred_region
      %118 = dma.done [#allocation12], 256
    $region69: #{tpu_custom_call.1} parent=1 // pred_fallthru
      _
    %v119 = vld [vmem:[%s0] sm:$0xff]
    %v120 = vld [vmem:[%s0 + $0x8] sm:$0xff]
    %123 = vrot.lane.b32.xlu0 %v119, 116
    %v124 = vpop.permute.xlu0 %123
    %125 = vrot.lane.b32.xlu0 %v120, 116
    %v126 = vpop.permute.xlu0 %125
    %vm129 = vcmask 31744
    %v130 = vsel %vm129, %v124, 0.0
    %131 = vadd.xlane.f32.xlu0 %v130
    %v132 = vpop.xlane.xlu0 %131
    %v133 = vsel %vm129, %v126, 0.0
    %134 = vadd.xlane.f32.xlu0 %v133
    %v135 = vpop.xlane.xlu0 %134
    %v136 = vrcp.pop 4.0
    %v137 = vmul.f32 %v132, %v136
    %v138 = vmul.f32 %v135, %v136
    %v139 = vsub.f32 %v119, %v137
    %v140 = vsub.f32 %v120, %v138
    %v141 = vld [vmem:[#allocation2] sm:$0xff]
    %v142 = vld [vmem:[#allocation2 + $0x8] sm:$0xff]
    %v143 = vld [vmem:[#allocation5] sm:$0x1]
    %v145 = vlaneseq
    %v146 = vshrl.u32 %v145, 7
    %v147 = vsub.s32 0, %v146
    %v148 = vrot.slane %v143, %v147
    %vm150 = vcmask 130048
    %v152 = vsel %vm150, %v139, 0
    %v155 = vsel %vm150, %v140, 0
    %157 = vmatprep.subr.mxu0 0.0
    %158 = vmatpush1.msra.mxu0 %v141
    %159 = vmatprep.subr.mxu0 0.0
    %160 = vmatpush1.msra.mxu0 %v142
    %161 = vmatprep.subr.mxu0 0.0
    %162 = vmatpush1.msra.mxu0 0.0
    %163 = vmatprep.subr.mxu0 0.0
    %164 = vmatpush1.msra.mxu0 0.0
    %165 = vmatprep.subr.mxu0 0.0
    %166 = vmatpush1.msra.mxu0 0.0
    %167 = vmatprep.subr.mxu0 0.0
    %168 = vmatpush1.msra.mxu0 0.0
    %169 = vmatprep.subr.mxu0 0.0
    %170 = vmatpush1.msra.mxu0 0.0
    %171 = vmatprep.subr.mxu0 0.0
    %172 = vmatpush1.msra.mxu0 0.0
    %173 = vmatprep.subr.mxu0 0.0
    %174 = vmatpush1.msra.mxu0 0.0
    %175 = vmatprep.subr.mxu0 0.0
    %176 = vmatpush1.msra.mxu0 0.0
    %177 = vmatprep.subr.mxu0 0.0
    %178 = vmatpush1.msra.mxu0 0.0
    %179 = vmatprep.subr.mxu0 0.0
    %180 = vmatpush1.msra.mxu0 0.0
    %181 = vmatprep.subr.mxu0 0.0
    %182 = vmatpush1.msra.mxu0 0.0
    %183 = vmatprep.subr.mxu0 0.0
    %184 = vmatpush1.msra.mxu0 0.0
    %185 = vmatprep.subr.mxu0 0.0
    %186 = vmatpush1.msra.mxu0 0.0
    %187 = vmatprep.subr.mxu0 0.0
    %188 = vmatpush1.msra.mxu0 0.0
    %189 = vmatprep.subr.mxu0 0.0
    %190 = vmatpush1.msra.mxu0 0.0
    %191 = vmatprep.subr.mxu0 0.0
    %192 = vmatpush1.msra.mxu0 0.0
    %193 = vmatprep.subr.mxu0 0.0
    %194 = vmatpush1.msra.mxu0 0.0
    %195 = vmatprep.subr.mxu0 0.0
    %196 = vmatpush1.msra.mxu0 0.0
    %197 = vmatprep.subr.mxu0 0.0
    %198 = vmatpush1.msra.mxu0 0.0
    %199 = vmatprep.subr.mxu0 0.0
    %200 = vmatpush1.msra.mxu0 0.0
    %201 = vmatprep.subr.mxu0 0.0
    %202 = vmatpush1.msra.mxu0 0.0
    %203 = vmatprep.subr.mxu0 0.0
    %204 = vmatpush1.msra.mxu0 0.0
    %205 = vmatprep.subr.mxu0 0.0
    %206 = vmatpush1.msra.mxu0 0.0
    %207 = vmatprep.subr.mxu0 0.0
    %208 = vmatpush1.msra.mxu0 0.0
    %209 = vmatprep.subr.mxu0 0.0
    %210 = vmatpush1.msra.mxu0 0.0
    %211 = vmatprep.subr.mxu0 0.0
    %212 = vmatpush1.msra.mxu0 0.0
    %213 = vmatprep.subr.mxu0 0.0
    %214 = vmatpush1.msra.mxu0 0.0
    %215 = vmatprep.subr.mxu0 0.0
    %216 = vmatpush1.msra.mxu0 0.0
    %217 = vmatprep.subr.mxu0 0.0
    %218 = vmatpush1.msra.mxu0 0.0
    %219 = vmatprep.subr.mxu0 0.0
    %220 = vmatpush1.msra.mxu0 0.0
    %221 = vmatprep.mubr.f32.mxu0 0.0
    %222 = vmatmul.mubr.f32.gmra.mrb[0].mxu0 %v152
    %v223 = vpop.f32.mrb[0].mxu0
    %v224 = vadd.f32 %v148, %v223
    %v225 = vpop.f32.mrb[0].mxu0
    %226 = vmatprep.mubr.f32.mxu0 0.0
    %227 = vmatmul.mubr.f32.gmra.mrb[0].mxu0 %v155
    %v228 = vpop.f32.mrb[0].mxu0
    %v229 = vadd.f32 %v148, %v228
    %v230 = vpop.f32.mrb[0].mxu0
    %231 = vdwg.mxu0
    %v232 = vld [vmem:[#allocation7] sm:$0xff]
    %v233 = vld [vmem:[#allocation7 + $0x8] sm:$0xff]
    %v234 = vld [vmem:[#allocation8] sm:$0x1]
    %v236 = vlaneseq
    %v237 = vshrl.u32 %v236, 7
    %v238 = vsub.s32 0, %v237
    %v239 = vrot.slane %v234, %v238
    %v242 = vsel %vm150, %v224, 0
    %v245 = vsel %vm150, %v229, 0
    %247 = vmatprep.subr.mxu0 0.0
    %248 = vmatpush1.msra.mxu0 %v232
    %249 = vmatprep.subr.mxu0 0.0
    %250 = vmatpush1.msra.mxu0 %v233
    %251 = vmatprep.subr.mxu0 0.0
    %252 = vmatpush1.msra.mxu0 0.0
    %253 = vmatprep.subr.mxu0 0.0
    %254 = vmatpush1.msra.mxu0 0.0
    %255 = vmatprep.subr.mxu0 0.0
    %256 = vmatpush1.msra.mxu0 0.0
    %257 = vmatprep.subr.mxu0 0.0
    %258 = vmatpush1.msra.mxu0 0.0
    %259 = vmatprep.subr.mxu0 0.0
    %260 = vmatpush1.msra.mxu0 0.0
    %261 = vmatprep.subr.mxu0 0.0
    %262 = vmatpush1.msra.mxu0 0.0
    %263 = vmatprep.subr.mxu0 0.0
    %264 = vmatpush1.msra.mxu0 0.0
    %265 = vmatprep.subr.mxu0 0.0
    %266 = vmatpush1.msra.mxu0 0.0
    %267 = vmatprep.subr.mxu0 0.0
    %268 = vmatpush1.msra.mxu0 0.0
    %269 = vmatprep.subr.mxu0 0.0
    %270 = vmatpush1.msra.mxu0 0.0
    %271 = vmatprep.subr.mxu0 0.0
    %272 = vmatpush1.msra.mxu0 0.0
    %273 = vmatprep.subr.mxu0 0.0
    %274 = vmatpush1.msra.mxu0 0.0
    %275 = vmatprep.subr.mxu0 0.0
    %276 = vmatpush1.msra.mxu0 0.0
    %277 = vmatprep.subr.mxu0 0.0
    %278 = vmatpush1.msra.mxu0 0.0
    %279 = vmatprep.subr.mxu0 0.0
    %280 = vmatpush1.msra.mxu0 0.0
    %281 = vmatprep.subr.mxu0 0.0
    %282 = vmatpush1.msra.mxu0 0.0
    %283 = vmatprep.subr.mxu0 0.0
    %284 = vmatpush1.msra.mxu0 0.0
    %285 = vmatprep.subr.mxu0 0.0
    %286 = vmatpush1.msra.mxu0 0.0
    %287 = vmatprep.subr.mxu0 0.0
    %288 = vmatpush1.msra.mxu0 0.0
    %289 = vmatprep.subr.mxu0 0.0
    %290 = vmatpush1.msra.mxu0 0.0
    %291 = vmatprep.subr.mxu0 0.0
    %292 = vmatpush1.msra.mxu0 0.0
    %293 = vmatprep.subr.mxu0 0.0
    %294 = vmatpush1.msra.mxu0 0.0
    %295 = vmatprep.subr.mxu0 0.0
    %296 = vmatpush1.msra.mxu0 0.0
    %297 = vmatprep.subr.mxu0 0.0
    %298 = vmatpush1.msra.mxu0 0.0
    %299 = vmatprep.subr.mxu0 0.0
    %300 = vmatpush1.msra.mxu0 0.0
    %301 = vmatprep.subr.mxu0 0.0
    %302 = vmatpush1.msra.mxu0 0.0
    %303 = vmatprep.subr.mxu0 0.0
    %304 = vmatpush1.msra.mxu0 0.0
    %305 = vmatprep.subr.mxu0 0.0
    %306 = vmatpush1.msra.mxu0 0.0
    %307 = vmatprep.subr.mxu0 0.0
    %308 = vmatpush1.msra.mxu0 0.0
    %309 = vmatprep.subr.mxu0 0.0
    %310 = vmatpush1.msra.mxu0 0.0
    %311 = vmatprep.mubr.f32.mxu0 0.0
    %312 = vmatmul.mubr.f32.gmra.mrb[0].mxu0 %v242
    %v313 = vpop.f32.mrb[0].mxu0
    %v314 = vadd.f32 %v239, %v313
    %v315 = vpop.f32.mrb[0].mxu0
    %316 = vmatprep.mubr.f32.mxu0 0.0
    %317 = vmatmul.mubr.f32.gmra.mrb[0].mxu0 %v245
    %v318 = vpop.f32.mrb[0].mxu0
    %v319 = vadd.f32 %v239, %v318
    %v320 = vpop.f32.mrb[0].mxu0
    %321 = vdwg.mxu0
    %v322 = vmax.f32 %v314, 0.0
    %v323 = vmax.f32 %v319, 0.0
    %v324 = vadd.f32 %v322, %v224
    %v325 = vadd.f32 %v323, %v229
    %v326 = vld [vmem:[%s5] sm:$0xff]
    %v327 = vld [vmem:[%s6] sm:$0xff]
    %v328 = vld [vmem:[#allocation10] sm:$0xff]
    %v329 = vld [vmem:[%s8] sm:$0xff]
    %331 = vset.pattern.permute.xlu0 0
    %332 = vperm.xlu0 %331, %v327
    %v333 = vpop.permute.xlu0 %332
    %vm335 = vcmask 64512
    %v337 = vsel %vm335, %v326, 0
    %339 = vmatprep.subr.mxu0 0.0
    %340 = vmatpush1.msra.mxu0 %v324
    %341 = vmatprep.subr.mxu0 0.0
    %342 = vmatpush1.msra.mxu0 0.0
    %343 = vmatprep.subr.mxu0 0.0
    %344 = vmatpush1.msra.mxu0 0.0
    %345 = vmatprep.subr.mxu0 0.0
    %346 = vmatpush1.msra.mxu0 0.0
    %347 = vmatprep.subr.mxu0 0.0
    %348 = vmatpush1.msra.mxu0 0.0
    %349 = vmatprep.subr.mxu0 0.0
    %350 = vmatpush1.msra.mxu0 0.0
    %351 = vmatprep.subr.mxu0 0.0
    %352 = vmatpush1.msra.mxu0 0.0
    %353 = vmatprep.subr.mxu0 0.0
    %354 = vmatpush1.msra.mxu0 0.0
    %355 = vmatprep.subr.mxu0 0.0
    %356 = vmatpush1.msra.mxu0 0.0
    %357 = vmatprep.subr.mxu0 0.0
    %358 = vmatpush1.msra.mxu0 0.0
    %359 = vmatprep.subr.mxu0 0.0
    %360 = vmatpush1.msra.mxu0 0.0
    %361 = vmatprep.subr.mxu0 0.0
    %362 = vmatpush1.msra.mxu0 0.0
    %363 = vmatprep.subr.mxu0 0.0
    %364 = vmatpush1.msra.mxu0 0.0
    %365 = vmatprep.subr.mxu0 0.0
    %366 = vmatpush1.msra.mxu0 0.0
    %367 = vmatprep.subr.mxu0 0.0
    %368 = vmatpush1.msra.mxu0 0.0
    %369 = vmatprep.subr.mxu0 0.0
    %370 = vmatpush1.msra.mxu0 0.0
    %371 = vmatprep.subr.mxu0 0.0
    %372 = vmatpush1.msra.mxu0 0.0
    %373 = vmatprep.subr.mxu0 0.0
    %374 = vmatpush1.msra.mxu0 0.0
    %375 = vmatprep.subr.mxu0 0.0
    %376 = vmatpush1.msra.mxu0 0.0
    %377 = vmatprep.subr.mxu0 0.0
    %378 = vmatpush1.msra.mxu0 0.0
    %379 = vmatprep.subr.mxu0 0.0
    %380 = vmatpush1.msra.mxu0 0.0
    %381 = vmatprep.subr.mxu0 0.0
    %382 = vmatpush1.msra.mxu0 0.0
    %383 = vmatprep.subr.mxu0 0.0
    %384 = vmatpush1.msra.mxu0 0.0
    %385 = vmatprep.subr.mxu0 0.0
    %386 = vmatpush1.msra.mxu0 0.0
    %387 = vmatprep.subr.mxu0 0.0
    %388 = vmatpush1.msra.mxu0 0.0
    %389 = vmatprep.subr.mxu0 0.0
    %390 = vmatpush1.msra.mxu0 0.0
    %391 = vmatprep.subr.mxu0 0.0
    %392 = vmatpush1.msra.mxu0 0.0
    %393 = vmatprep.subr.mxu0 0.0
    %394 = vmatpush1.msra.mxu0 0.0
    %395 = vmatprep.subr.mxu0 0.0
    %396 = vmatpush1.msra.mxu0 0.0
    %397 = vmatprep.subr.mxu0 0.0
    %398 = vmatpush1.msra.mxu0 0.0
    %399 = vmatprep.subr.mxu0 0.0
    %400 = vmatpush1.msra.mxu0 0.0
    %401 = vmatprep.subr.mxu0 0.0
    %402 = vmatpush1.msra.mxu0 0.0
    %403 = vmatprep.mubr.f32.mxu0 0.0
    %404 = vmatmul.mubr.f32.gmra.mrb[0].mxu0 %v337
    %v405 = vpop.f32.mrb[0].mxu0
    %v406 = vadd.f32 %v333, %v405
    %v407 = vpop.f32.mrb[0].mxu0
    %408 = vdwg.mxu0
    %vm409 = vcmp.gt.f32.partialorder %v406, 0.0
    %v410 = vmul.f32 %v406, 1.442695
    %v411 = vpow.pop %v410
    %v412 = vsub.f32 %v411, 1.0
    %v413 = vmul.f32 %v412, 1.6732632
    %v414 = vsel %vm409, %v406, %v413
    %v415 = vmul.f32 %v414, 1.050701
    %v416 = vadd.f32 %v415, %v324
    %v417 = vsel %vm150, %v416, 0.0
    %418 = vadd.xlane.f32.xlu0 %v417
    %v419 = vpop.xlane.xlu0 %418
    %v420 = vrot.slane %v419, 4
    %v421 = vadd.f32 %v419, %v420
    %v422 = vrot.slane %v421, 2
    %v423 = vadd.f32 %v421, %v422
    %v424 = vrot.slane %v423, 1
    %v425 = vadd.f32 %v423, %v424
    %s426 = vtos %v425
    %v427 = vstv %s426
    %v428 = vmul.f32 %v427, 0.0078125
    %v429 = vmul.f32 %v416, %v416
    %v430 = vsel %vm150, %v429, 0.0
    %431 = vadd.xlane.f32.xlu0 %v430
    %v432 = vpop.xlane.xlu0 %431
    %v433 = vrot.slane %v432, 4
    %v434 = vadd.f32 %v432, %v433
    %v435 = vrot.slane %v434, 2
    %v436 = vadd.f32 %v434, %v435
    %v437 = vrot.slane %v436, 1
    %v438 = vadd.f32 %v436, %v437
    %s439 = vtos %v438
    %v440 = vstv %s439
    %v441 = vmul.f32 %v440, 0.0078125
    %v442 = vmul.f32 %v428, %v428
    %v443 = vsub.f32 %v441, %v442
    %v444 = vsub.f32 %v416, %v428
    %v445 = vadd.f32 %v443, 1e-05
    %v446 = vrsqrt.pop %v445
    %v447 = vmul.f32 %v444, %v446
    %v448 = vmul.f32 %v447, %v328
    %v449 = vadd.f32 %v448, %v329
    %450 = vmatprep.subr.mxu0 0.0
    %451 = vmatpush1.msra.mxu0 %v325
    %452 = vmatprep.subr.mxu0 0.0
    %453 = vmatpush1.msra.mxu0 0.0
    %454 = vmatprep.subr.mxu0 0.0
    %455 = vmatpush1.msra.mxu0 0.0
    %456 = vmatprep.subr.mxu0 0.0
    %457 = vmatpush1.msra.mxu0 0.0
    %458 = vmatprep.subr.mxu0 0.0
    %459 = vmatpush1.msra.mxu0 0.0
    %460 = vmatprep.subr.mxu0 0.0
    %461 = vmatpush1.msra.mxu0 0.0
    %462 = vmatprep.subr.mxu0 0.0
    %463 = vmatpush1.msra.mxu0 0.0
    %464 = vmatprep.subr.mxu0 0.0
    %465 = vmatpush1.msra.mxu0 0.0
    %466 = vmatprep.subr.mxu0 0.0
    %467 = vmatpush1.msra.mxu0 0.0
    %468 = vmatprep.subr.mxu0 0.0
    %469 = vmatpush1.msra.mxu0 0.0
    %470 = vmatprep.subr.mxu0 0.0
    %471 = vmatpush1.msra.mxu0 0.0
    %472 = vmatprep.subr.mxu0 0.0
    %473 = vmatpush1.msra.mxu0 0.0
    %474 = vmatprep.subr.mxu0 0.0
    %475 = vmatpush1.msra.mxu0 0.0
    %476 = vmatprep.subr.mxu0 0.0
    %477 = vmatpush1.msra.mxu0 0.0
    %478 = vmatprep.subr.mxu0 0.0
    %479 = vmatpush1.msra.mxu0 0.0
    %480 = vmatprep.subr.mxu0 0.0
    %481 = vmatpush1.msra.mxu0 0.0
    %482 = vmatprep.subr.mxu0 0.0
    %483 = vmatpush1.msra.mxu0 0.0
    %484 = vmatprep.subr.mxu0 0.0
    %485 = vmatpush1.msra.mxu0 0.0
    %486 = vmatprep.subr.mxu0 0.0
    %487 = vmatpush1.msra.mxu0 0.0
    %488 = vmatprep.subr.mxu0 0.0
    %489 = vmatpush1.msra.mxu0 0.0
    %490 = vmatprep.subr.mxu0 0.0
    %491 = vmatpush1.msra.mxu0 0.0
    %492 = vmatprep.subr.mxu0 0.0
    %493 = vmatpush1.msra.mxu0 0.0
    %494 = vmatprep.subr.mxu0 0.0
    %495 = vmatpush1.msra.mxu0 0.0
    %496 = vmatprep.subr.mxu0 0.0
    %497 = vmatpush1.msra.mxu0 0.0
    %498 = vmatprep.subr.mxu0 0.0
    %499 = vmatpush1.msra.mxu0 0.0
    %500 = vmatprep.subr.mxu0 0.0
    %501 = vmatpush1.msra.mxu0 0.0
    %502 = vmatprep.subr.mxu0 0.0
    %503 = vmatpush1.msra.mxu0 0.0
    %504 = vmatprep.subr.mxu0 0.0
    %505 = vmatpush1.msra.mxu0 0.0
    %506 = vmatprep.subr.mxu0 0.0
    %507 = vmatpush1.msra.mxu0 0.0
    %508 = vmatprep.subr.mxu0 0.0
    %509 = vmatpush1.msra.mxu0 0.0
    %510 = vmatprep.subr.mxu0 0.0
    %511 = vmatpush1.msra.mxu0 0.0
    %512 = vmatprep.subr.mxu0 0.0
    %513 = vmatpush1.msra.mxu0 0.0
    %514 = vmatprep.mubr.f32.mxu0 0.0
    %515 = vmatmul.mubr.f32.gmra.mrb[0].mxu0 %v337
    %v516 = vpop.f32.mrb[0].mxu0
    %v517 = vadd.f32 %v333, %v516
    %v518 = vpop.f32.mrb[0].mxu0
    %519 = vdwg.mxu0
    %vm520 = vcmp.gt.f32.partialorder %v517, 0.0
    %v521 = vmul.f32 %v517, 1.442695
    %v522 = vpow.pop %v521
    %v523 = vsub.f32 %v522, 1.0
    %v524 = vmul.f32 %v523, 1.6732632
    %v525 = vsel %vm520, %v517, %v524
    %v526 = vmul.f32 %v525, 1.050701
    %v527 = vadd.f32 %v526, %v325
    %v528 = vsel %vm150, %v527, 0.0
    %529 = vadd.xlane.f32.xlu0 %v528
    %v530 = vpop.xlane.xlu0 %529
    %v531 = vrot.slane %v530, 4
    %v532 = vadd.f32 %v530, %v531
    %v533 = vrot.slane %v532, 2
    %v534 = vadd.f32 %v532, %v533
    %v535 = vrot.slane %v534, 1
    %v536 = vadd.f32 %v534, %v535
    %s537 = vtos %v536
    %v538 = vstv %s537
    %v539 = vmul.f32 %v538, 0.0078125
    %v540 = vmul.f32 %v527, %v527
    %v541 = vsel %vm150, %v540, 0.0
    %542 = vadd.xlane.f32.xlu0 %v541
    %v543 = vpop.xlane.xlu0 %542
    %v544 = vrot.slane %v543, 4
    %v545 = vadd.f32 %v543, %v544
    %v546 = vrot.slane %v545, 2
    %v547 = vadd.f32 %v545, %v546
    %v548 = vrot.slane %v547, 1
    %v549 = vadd.f32 %v547, %v548
    %s550 = vtos %v549
    %v551 = vstv %s550
    %v552 = vmul.f32 %v551, 0.0078125
    %v553 = vmul.f32 %v539, %v539
    %v554 = vsub.f32 %v552, %v553
    %v555 = vsub.f32 %v527, %v539
    %v556 = vadd.f32 %v554, 1e-05
    %v557 = vrsqrt.pop %v556
    %v558 = vmul.f32 %v555, %v557
    %v559 = vmul.f32 %v558, %v328
    %v560 = vadd.f32 %v559, %v329
    %s561 = scalar_lea.vmem [#allocation7], 16
    %v562 = vld [vmem:[%s561] sm:$0xff]
    %v563 = vld [vmem:[%s561 + $0x8] sm:$0xff]
    %s564 = scalar_lea.vmem [#allocation8], 1
    %v565 = vld [vmem:[%s564] sm:$0x1]
    %v567 = vlaneseq
    %v568 = vshrl.u32 %v567, 7
    %v569 = vsub.s32 0, %v568
    %v570 = vrot.slane %v565, %v569
    %v573 = vsel %vm150, %v449, 0
    %v576 = vsel %vm150, %v560, 0
    %578 = vmatprep.subr.mxu0 0.0
    %579 = vmatpush1.msra.mxu0 %v562
    %580 = vmatprep.subr.mxu0 0.0
    %581 = vmatpush1.msra.mxu0 %v563
    %582 = vmatprep.subr.mxu0 0.0
    %583 = vmatpush1.msra.mxu0 0.0
    %584 = vmatprep.subr.mxu0 0.0
    %585 = vmatpush1.msra.mxu0 0.0
    %586 = vmatprep.subr.mxu0 0.0
    %587 = vmatpush1.msra.mxu0 0.0
    %588 = vmatprep.subr.mxu0 0.0
    %589 = vmatpush1.msra.mxu0 0.0
    %590 = vmatprep.subr.mxu0 0.0
    %591 = vmatpush1.msra.mxu0 0.0
    %592 = vmatprep.subr.mxu0 0.0
    %593 = vmatpush1.msra.mxu0 0.0
    %594 = vmatprep.subr.mxu0 0.0
    %595 = vmatpush1.msra.mxu0 0.0
    %596 = vmatprep.subr.mxu0 0.0
    %597 = vmatpush1.msra.mxu0 0.0
    %598 = vmatprep.subr.mxu0 0.0
    %599 = vmatpush1.msra.mxu0 0.0
    %600 = vmatprep.subr.mxu0 0.0
    %601 = vmatpush1.msra.mxu0 0.0
    %602 = vmatprep.subr.mxu0 0.0
    %603 = vmatpush1.msra.mxu0 0.0
    %604 = vmatprep.subr.mxu0 0.0
    %605 = vmatpush1.msra.mxu0 0.0
    %606 = vmatprep.subr.mxu0 0.0
    %607 = vmatpush1.msra.mxu0 0.0
    %608 = vmatprep.subr.mxu0 0.0
    %609 = vmatpush1.msra.mxu0 0.0
    %610 = vmatprep.subr.mxu0 0.0
    %611 = vmatpush1.msra.mxu0 0.0
    %612 = vmatprep.subr.mxu0 0.0
    %613 = vmatpush1.msra.mxu0 0.0
    %614 = vmatprep.subr.mxu0 0.0
    %615 = vmatpush1.msra.mxu0 0.0
    %616 = vmatprep.subr.mxu0 0.0
    %617 = vmatpush1.msra.mxu0 0.0
    %618 = vmatprep.subr.mxu0 0.0
    %619 = vmatpush1.msra.mxu0 0.0
    %620 = vmatprep.subr.mxu0 0.0
    %621 = vmatpush1.msra.mxu0 0.0
    %622 = vmatprep.subr.mxu0 0.0
    %623 = vmatpush1.msra.mxu0 0.0
    %624 = vmatprep.subr.mxu0 0.0
    %625 = vmatpush1.msra.mxu0 0.0
    %626 = vmatprep.subr.mxu0 0.0
    %627 = vmatpush1.msra.mxu0 0.0
    %628 = vmatprep.subr.mxu0 0.0
    %629 = vmatpush1.msra.mxu0 0.0
    %630 = vmatprep.subr.mxu0 0.0
    %631 = vmatpush1.msra.mxu0 0.0
    %632 = vmatprep.subr.mxu0 0.0
    %633 = vmatpush1.msra.mxu0 0.0
    %634 = vmatprep.subr.mxu0 0.0
    %635 = vmatpush1.msra.mxu0 0.0
    %636 = vmatprep.subr.mxu0 0.0
    %637 = vmatpush1.msra.mxu0 0.0
    %638 = vmatprep.subr.mxu0 0.0
    %639 = vmatpush1.msra.mxu0 0.0
    %640 = vmatprep.subr.mxu0 0.0
    %641 = vmatpush1.msra.mxu0 0.0
    %642 = vmatprep.mubr.f32.mxu0 0.0
    %643 = vmatmul.mubr.f32.gmra.mrb[0].mxu0 %v573
    %v644 = vpop.f32.mrb[0].mxu0
    %v645 = vadd.f32 %v570, %v644
    %v646 = vpop.f32.mrb[0].mxu0
    %647 = vmatprep.mubr.f32.mxu0 0.0
    %648 = vmatmul.mubr.f32.gmra.mrb[0].mxu0 %v576
    %v649 = vpop.f32.mrb[0].mxu0
    %v650 = vadd.f32 %v570, %v649
    %v651 = vpop.f32.mrb[0].mxu0
    %652 = vdwg.mxu0
    %v653 = vmax.f32 %v645, 0.0
    %v654 = vmax.f32 %v650, 0.0
    %v655 = vadd.f32 %v653, %v449
    %v656 = vadd.f32 %v654, %v560
    %s657 = scalar_lea.vmem %s5, 8
    %v658 = vld [vmem:[%s657] sm:$0xff]
    %s659 = scalar_lea.vmem %s6, 8
    %v660 = vld [vmem:[%s659] sm:$0xff]
    %s661 = scalar_lea.vmem [#allocation10], 8
    %v662 = vld [vmem:[%s661] sm:$0xff]
    %s663 = scalar_lea.vmem %s8, 8
    %v664 = vld [vmem:[%s663] sm:$0xff]
    %666 = vset.pattern.permute.xlu0 0
    %667 = vperm.xlu0 %666, %v660
    %v668 = vpop.permute.xlu0 %667
    %v671 = vsel %vm335, %v658, 0
    %673 = vmatprep.subr.mxu0 0.0
    %674 = vmatpush1.msra.mxu0 %v655
    %675 = vmatprep.subr.mxu0 0.0
    %676 = vmatpush1.msra.mxu0 0.0
    %677 = vmatprep.subr.mxu0 0.0
    %678 = vmatpush1.msra.mxu0 0.0
    %679 = vmatprep.subr.mxu0 0.0
    %680 = vmatpush1.msra.mxu0 0.0
    %681 = vmatprep.subr.mxu0 0.0
    %682 = vmatpush1.msra.mxu0 0.0
    %683 = vmatprep.subr.mxu0 0.0
    %684 = vmatpush1.msra.mxu0 0.0
    %685 = vmatprep.subr.mxu0 0.0
    %686 = vmatpush1.msra.mxu0 0.0
    %687 = vmatprep.subr.mxu0 0.0
    %688 = vmatpush1.msra.mxu0 0.0
    %689 = vmatprep.subr.mxu0 0.0
    %690 = vmatpush1.msra.mxu0 0.0
    %691 = vmatprep.subr.mxu0 0.0
    %692 = vmatpush1.msra.mxu0 0.0
    %693 = vmatprep.subr.mxu0 0.0
    %694 = vmatpush1.msra.mxu0 0.0
    %695 = vmatprep.subr.mxu0 0.0
    %696 = vmatpush1.msra.mxu0 0.0
    %697 = vmatprep.subr.mxu0 0.0
    %698 = vmatpush1.msra.mxu0 0.0
    %699 = vmatprep.subr.mxu0 0.0
    %700 = vmatpush1.msra.mxu0 0.0
    %701 = vmatprep.subr.mxu0 0.0
    %702 = vmatpush1.msra.mxu0 0.0
    %703 = vmatprep.subr.mxu0 0.0
    %704 = vmatpush1.msra.mxu0 0.0
    %705 = vmatprep.subr.mxu0 0.0
    %706 = vmatpush1.msra.mxu0 0.0
    %707 = vmatprep.subr.mxu0 0.0
    %708 = vmatpush1.msra.mxu0 0.0
    %709 = vmatprep.subr.mxu0 0.0
    %710 = vmatpush1.msra.mxu0 0.0
    %711 = vmatprep.subr.mxu0 0.0
    %712 = vmatpush1.msra.mxu0 0.0
    %713 = vmatprep.subr.mxu0 0.0
    %714 = vmatpush1.msra.mxu0 0.0
    %715 = vmatprep.subr.mxu0 0.0
    %716 = vmatpush1.msra.mxu0 0.0
    %717 = vmatprep.subr.mxu0 0.0
    %718 = vmatpush1.msra.mxu0 0.0
    %719 = vmatprep.subr.mxu0 0.0
    %720 = vmatpush1.msra.mxu0 0.0
    %721 = vmatprep.subr.mxu0 0.0
    %722 = vmatpush1.msra.mxu0 0.0
    %723 = vmatprep.subr.mxu0 0.0
    %724 = vmatpush1.msra.mxu0 0.0
    %725 = vmatprep.subr.mxu0 0.0
    %726 = vmatpush1.msra.mxu0 0.0
    %727 = vmatprep.subr.mxu0 0.0
    %728 = vmatpush1.msra.mxu0 0.0
    %729 = vmatprep.subr.mxu0 0.0
    %730 = vmatpush1.msra.mxu0 0.0
    %731 = vmatprep.subr.mxu0 0.0
    %732 = vmatpush1.msra.mxu0 0.0
    %733 = vmatprep.subr.mxu0 0.0
    %734 = vmatpush1.msra.mxu0 0.0
    %735 = vmatprep.subr.mxu0 0.0
    %736 = vmatpush1.msra.mxu0 0.0
    %737 = vmatprep.mubr.f32.mxu0 0.0
    %738 = vmatmul.mubr.f32.gmra.mrb[0].mxu0 %v671
    %v739 = vpop.f32.mrb[0].mxu0
    %v740 = vadd.f32 %v668, %v739
    %v741 = vpop.f32.mrb[0].mxu0
    %742 = vdwg.mxu0
    %vm743 = vcmp.gt.f32.partialorder %v740, 0.0
    %v744 = vmul.f32 %v740, 1.442695
    %v745 = vpow.pop %v744
    %v746 = vsub.f32 %v745, 1.0
    %v747 = vmul.f32 %v746, 1.6732632
    %v748 = vsel %vm743, %v740, %v747
    %v749 = vmul.f32 %v748, 1.050701
    %v750 = vadd.f32 %v749, %v655
    %v751 = vsel %vm150, %v750, 0.0
    %752 = vadd.xlane.f32.xlu0 %v751
    %v753 = vpop.xlane.xlu0 %752
    %v754 = vrot.slane %v753, 4
    %v755 = vadd.f32 %v753, %v754
    %v756 = vrot.slane %v755, 2
    %v757 = vadd.f32 %v755, %v756
    %v758 = vrot.slane %v757, 1
    %v759 = vadd.f32 %v757, %v758
    %s760 = vtos %v759
    %v761 = vstv %s760
    %v762 = vmul.f32 %v761, 0.0078125
    %v763 = vmul.f32 %v750, %v750
    %v764 = vsel %vm150, %v763, 0.0
    %765 = vadd.xlane.f32.xlu0 %v764
    %v766 = vpop.xlane.xlu0 %765
    %v767 = vrot.slane %v766, 4
    %v768 = vadd.f32 %v766, %v767
    %v769 = vrot.slane %v768, 2
    %v770 = vadd.f32 %v768, %v769
    %v771 = vrot.slane %v770, 1
    %v772 = vadd.f32 %v770, %v771
    %s773 = vtos %v772
    %v774 = vstv %s773
    %v775 = vmul.f32 %v774, 0.0078125
    %v776 = vmul.f32 %v762, %v762
    %v777 = vsub.f32 %v775, %v776
    %v778 = vsub.f32 %v750, %v762
    %v779 = vadd.f32 %v777, 1e-05
    %v780 = vrsqrt.pop %v779
    %v781 = vmul.f32 %v778, %v780
    %v782 = vmul.f32 %v781, %v662
    %v783 = vadd.f32 %v782, %v664
    %784 = vmatprep.subr.mxu0 0.0
    %785 = vmatpush1.msra.mxu0 %v656
    %786 = vmatprep.subr.mxu0 0.0
    %787 = vmatpush1.msra.mxu0 0.0
    %788 = vmatprep.subr.mxu0 0.0
    %789 = vmatpush1.msra.mxu0 0.0
    %790 = vmatprep.subr.mxu0 0.0
    %791 = vmatpush1.msra.mxu0 0.0
    %792 = vmatprep.subr.mxu0 0.0
    %793 = vmatpush1.msra.mxu0 0.0
    %794 = vmatprep.subr.mxu0 0.0
    %795 = vmatpush1.msra.mxu0 0.0
    %796 = vmatprep.subr.mxu0 0.0
    %797 = vmatpush1.msra.mxu0 0.0
    %798 = vmatprep.subr.mxu0 0.0
    %799 = vmatpush1.msra.mxu0 0.0
    %800 = vmatprep.subr.mxu0 0.0
    %801 = vmatpush1.msra.mxu0 0.0
    %802 = vmatprep.subr.mxu0 0.0
    %803 = vmatpush1.msra.mxu0 0.0
    %804 = vmatprep.subr.mxu0 0.0
    %805 = vmatpush1.msra.mxu0 0.0
    %806 = vmatprep.subr.mxu0 0.0
    %807 = vmatpush1.msra.mxu0 0.0
    %808 = vmatprep.subr.mxu0 0.0
    %809 = vmatpush1.msra.mxu0 0.0
    %810 = vmatprep.subr.mxu0 0.0
    %811 = vmatpush1.msra.mxu0 0.0
    %812 = vmatprep.subr.mxu0 0.0
    %813 = vmatpush1.msra.mxu0 0.0
    %814 = vmatprep.subr.mxu0 0.0
    %815 = vmatpush1.msra.mxu0 0.0
    %816 = vmatprep.subr.mxu0 0.0
    %817 = vmatpush1.msra.mxu0 0.0
    %818 = vmatprep.subr.mxu0 0.0
    %819 = vmatpush1.msra.mxu0 0.0
    %820 = vmatprep.subr.mxu0 0.0
    %821 = vmatpush1.msra.mxu0 0.0
    %822 = vmatprep.subr.mxu0 0.0
    %823 = vmatpush1.msra.mxu0 0.0
    %824 = vmatprep.subr.mxu0 0.0
    %825 = vmatpush1.msra.mxu0 0.0
    %826 = vmatprep.subr.mxu0 0.0
    %827 = vmatpush1.msra.mxu0 0.0
    %828 = vmatprep.subr.mxu0 0.0
    %829 = vmatpush1.msra.mxu0 0.0
    %830 = vmatprep.subr.mxu0 0.0
    %831 = vmatpush1.msra.mxu0 0.0
    %832 = vmatprep.subr.mxu0 0.0
    %833 = vmatpush1.msra.mxu0 0.0
    %834 = vmatprep.subr.mxu0 0.0
    %835 = vmatpush1.msra.mxu0 0.0
    %836 = vmatprep.subr.mxu0 0.0
    %837 = vmatpush1.msra.mxu0 0.0
    %838 = vmatprep.subr.mxu0 0.0
    %839 = vmatpush1.msra.mxu0 0.0
    %840 = vmatprep.subr.mxu0 0.0
    %841 = vmatpush1.msra.mxu0 0.0
    %842 = vmatprep.subr.mxu0 0.0
    %843 = vmatpush1.msra.mxu0 0.0
    %844 = vmatprep.subr.mxu0 0.0
    %845 = vmatpush1.msra.mxu0 0.0
    %846 = vmatprep.subr.mxu0 0.0
    %847 = vmatpush1.msra.mxu0 0.0
    %848 = vmatprep.mubr.f32.mxu0 0.0
    %849 = vmatmul.mubr.f32.gmra.mrb[0].mxu0 %v671
    %v850 = vpop.f32.mrb[0].mxu0
    %v851 = vadd.f32 %v668, %v850
    %v852 = vpop.f32.mrb[0].mxu0
    %853 = vdwg.mxu0
    %vm854 = vcmp.gt.f32.partialorder %v851, 0.0
    %v855 = vmul.f32 %v851, 1.442695
    %v856 = vpow.pop %v855
    %v857 = vsub.f32 %v856, 1.0
    %v858 = vmul.f32 %v857, 1.6732632
    %v859 = vsel %vm854, %v851, %v858
    %v860 = vmul.f32 %v859, 1.050701
    %v861 = vadd.f32 %v860, %v656
    %v862 = vsel %vm150, %v861, 0.0
    %863 = vadd.xlane.f32.xlu0 %v862
    %v864 = vpop.xlane.xlu0 %863
    %v865 = vrot.slane %v864, 4
    %v866 = vadd.f32 %v864, %v865
    %v867 = vrot.slane %v866, 2
    %v868 = vadd.f32 %v866, %v867
    %v869 = vrot.slane %v868, 1
    %v870 = vadd.f32 %v868, %v869
    %s871 = vtos %v870
    %v872 = vstv %s871
    %v873 = vmul.f32 %v872, 0.0078125
    %v874 = vmul.f32 %v861, %v861
    %v875 = vsel %vm150, %v874, 0.0
    %876 = vadd.xlane.f32.xlu0 %v875
    %v877 = vpop.xlane.xlu0 %876
    %v878 = vrot.slane %v877, 4
    %v879 = vadd.f32 %v877, %v878
    %v880 = vrot.slane %v879, 2
    %v881 = vadd.f32 %v879, %v880
    %v882 = vrot.slane %v881, 1
    %v883 = vadd.f32 %v881, %v882
    %s884 = vtos %v883
    %v885 = vstv %s884
    %v886 = vmul.f32 %v885, 0.0078125
    %v887 = vmul.f32 %v873, %v873
    %v888 = vsub.f32 %v886, %v887
    %v889 = vsub.f32 %v861, %v873
    %v890 = vadd.f32 %v888, 1e-05
    %v891 = vrsqrt.pop %v890
    %v892 = vmul.f32 %v889, %v891
    %v893 = vmul.f32 %v892, %v662
    %v894 = vadd.f32 %v893, %v664
    %v895 = vld [vmem:[#allocation11] sm:$0xff]
    %v896 = vld [vmem:[#allocation11 + $0x8] sm:$0xff]
    %v897 = vld [vmem:[%s10] sm:$0x1]
    %v899 = vlaneseq
    %v900 = vshrl.u32 %v899, 7
    %v901 = vsub.s32 0, %v900
    %v902 = vrot.slane %v897, %v901
    %v905 = vsel %vm150, %v783, 0
    %v908 = vsel %vm150, %v894, 0
    %910 = vmatprep.subr.mxu0 0.0
    %911 = vmatpush1.msra.mxu0 %v895
    %912 = vmatprep.subr.mxu0 0.0
    %913 = vmatpush1.msra.mxu0 %v896
    %914 = vmatprep.subr.mxu0 0.0
    %915 = vmatpush1.msra.mxu0 0.0
    %916 = vmatprep.subr.mxu0 0.0
    %917 = vmatpush1.msra.mxu0 0.0
    %918 = vmatprep.subr.mxu0 0.0
    %919 = vmatpush1.msra.mxu0 0.0
    %920 = vmatprep.subr.mxu0 0.0
    %921 = vmatpush1.msra.mxu0 0.0
    %922 = vmatprep.subr.mxu0 0.0
    %923 = vmatpush1.msra.mxu0 0.0
    %924 = vmatprep.subr.mxu0 0.0
    %925 = vmatpush1.msra.mxu0 0.0
    %926 = vmatprep.subr.mxu0 0.0
    %927 = vmatpush1.msra.mxu0 0.0
    %928 = vmatprep.subr.mxu0 0.0
    %929 = vmatpush1.msra.mxu0 0.0
    %930 = vmatprep.subr.mxu0 0.0
    %931 = vmatpush1.msra.mxu0 0.0
    %932 = vmatprep.subr.mxu0 0.0
    %933 = vmatpush1.msra.mxu0 0.0
    %934 = vmatprep.subr.mxu0 0.0
    %935 = vmatpush1.msra.mxu0 0.0
    %936 = vmatprep.subr.mxu0 0.0
    %937 = vmatpush1.msra.mxu0 0.0
    %938 = vmatprep.subr.mxu0 0.0
    %939 = vmatpush1.msra.mxu0 0.0
    %940 = vmatprep.subr.mxu0 0.0
    %941 = vmatpush1.msra.mxu0 0.0
    %942 = vmatprep.subr.mxu0 0.0
    %943 = vmatpush1.msra.mxu0 0.0
    %944 = vmatprep.subr.mxu0 0.0
    %945 = vmatpush1.msra.mxu0 0.0
    %946 = vmatprep.subr.mxu0 0.0
    %947 = vmatpush1.msra.mxu0 0.0
    %948 = vmatprep.subr.mxu0 0.0
    %949 = vmatpush1.msra.mxu0 0.0
    %950 = vmatprep.subr.mxu0 0.0
    %951 = vmatpush1.msra.mxu0 0.0
    %952 = vmatprep.subr.mxu0 0.0
    %953 = vmatpush1.msra.mxu0 0.0
    %954 = vmatprep.subr.mxu0 0.0
    %955 = vmatpush1.msra.mxu0 0.0
    %956 = vmatprep.subr.mxu0 0.0
    %957 = vmatpush1.msra.mxu0 0.0
    %958 = vmatprep.subr.mxu0 0.0
    %959 = vmatpush1.msra.mxu0 0.0
    %960 = vmatprep.subr.mxu0 0.0
    %961 = vmatpush1.msra.mxu0 0.0
    %962 = vmatprep.subr.mxu0 0.0
    %963 = vmatpush1.msra.mxu0 0.0
    %964 = vmatprep.subr.mxu0 0.0
    %965 = vmatpush1.msra.mxu0 0.0
    %966 = vmatprep.subr.mxu0 0.0
    %967 = vmatpush1.msra.mxu0 0.0
    %968 = vmatprep.subr.mxu0 0.0
    %969 = vmatpush1.msra.mxu0 0.0
    %970 = vmatprep.subr.mxu0 0.0
    %971 = vmatpush1.msra.mxu0 0.0
    %972 = vmatprep.subr.mxu0 0.0
    %973 = vmatpush1.msra.mxu0 0.0
    %974 = vmatprep.mubr.f32.mxu0 0.0
    %975 = vmatmul.mubr.f32.gmra.mrb[0].mxu0 %v905
    %v976 = vpop.f32.mrb[0].mxu0
    %v977 = vadd.f32 %v902, %v976
    %v978 = vpop.f32.mrb[0].mxu0
    %979 = vmatprep.mubr.f32.mxu0 0.0
    %980 = vmatmul.mubr.f32.gmra.mrb[0].mxu0 %v908
    %v981 = vpop.f32.mrb[0].mxu0
    %v982 = vadd.f32 %v902, %v981
    %v983 = vpop.f32.mrb[0].mxu0
    %984 = vdwg.mxu0
    %v985 = vadd.f32 %v977, %v137
    %v986 = vadd.f32 %v982, %v138
    %vm987 = vcmask 97280
    %988 = vst.msk [vmem:[#allocation13] sm:$0xff] %vm987, %v985
    %989 = vst.msk [vmem:[#allocation13 + $0x8] sm:$0xff] %vm987, %v986
    // Predicated region
    $region70: #{tpu_custom_call.1} parent=1 // pred_check
      _
    $region71: #{tpu_custom_call.1} parent=1 // pred_check_branch
      %991 = sbr.rel (0) target = $region73
    $region72: #{tpu_custom_call.1} parent=1 // pred_region
      %s993 = ssub.s32 256, 256
      %994 = vsyncadd [#allocation4], %s993
      %s995 = sshll.u32 [#allocation13], 4
      %s996 = int_to_ptr.vmem [resolvable:$true] %s995
      %1001 = dma.vmem_to_hbm [thread:$0]  %s996, 256, %s11, [#allocation4], 128, 128, 8
    $region73: #{tpu_custom_call.1} parent=1 // pred_fallthru
      _
    // Predicated region
    $region74: #{tpu_custom_call.1} parent=1 // pred_check
      _
    $region75: #{tpu_custom_call.1} parent=1 // pred_check_branch
      %1003 = sbr.rel (0) target = $region77
    $region76: #{tpu_custom_call.1} parent=1 // pred_region
      %1004 = dma.done [#allocation4], 256
    $region77: #{tpu_custom_call.1} parent=1 // pred_fallthru
      _
    %1005 = vsyncpa [#allocation3], 1
    %1006 = vsyncpa [#allocation6], 1
    %1007 = vsyncpa [#allocation9], 1
    %1008 = vsyncpa [#allocation12], 1
    %1009 = vsyncpa [#allocation4], 1

</llo_original>
